<compile_context>
chip_gen: v5e
topology: v5e:2x2
jax: 0.10.0
libtpu: 0.0.40
codegen_flags: <defaults>
</compile_context>

<pallas_src>
import functools

import jax
import jax.numpy as jnp
from jax.experimental import pallas as pl
from jax.experimental.pallas import tpu as pltpu


def _round_up(x, m):
    return ((x + m - 1) // m) * m


# ---------------------------------------------------------------------------
# Parameter packing: one contiguous f32 [rows, lanes] slab per MLP head.
# Layer i's weight occupies rows [w_off, w_off + d_in) (cols [0, d_out)) and
# its bias one row at b_off.  All row offsets are 8-aligned (sublane tile).
# With latent_dim == 1 the final layer's weight is stored TRANSPOSED as a
# single row so the kernel can do a VPU multiply + lane reduce instead of a
# (K, 1) matmul.
# ---------------------------------------------------------------------------
def pack_mlp_params(params, latent_dim):
    descs = []
    placements = []
    max_w = 1
    off = 0
    n = len(params)
    for i, (w, b) in enumerate(params):
        is_last = i == n - 1
        d_in, d_out = int(w.shape[0]), int(w.shape[1])
        if is_last and latent_dim == 1:
            w_block = w.reshape(1, d_in)            # [d_in, 1] stored as a row
            b_block = b.reshape(1, 1)
            max_w = max(max_w, d_in)
        else:
            w_block = w                              # [d_in, d_out]
            b_block = b.reshape(1, d_out)
            max_w = max(max_w, d_out)
        w_off = off
        off = _round_up(w_off + w_block.shape[0], 8)
        b_off = off
        off = _round_up(b_off + 1, 8)
        placements.append((w_off, w_block))
        placements.append((b_off, b_block))
        descs.append((w_off, b_off, d_in, d_out, is_last))
    rows = _round_up(off, 8)
    cols = _round_up(max_w, 128)                     # lane-dense slab
    buf = jnp.zeros((rows, cols), jnp.float32)
    for r0, blk in placements:
        r, c = blk.shape
        buf = buf.at[r0:r0 + r, 0:c].set(blk.astype(jnp.float32))
    return buf, tuple(descs)


# ---------------------------------------------------------------------------
# Fused kernel: both heads in one invocation, one lane-friendly output slab.
# ---------------------------------------------------------------------------
def _fused_measure_f_kernel(phi_desc, psi_desc, latent,
                            x1_ref, x2_ref, p1_ref, p2_ref, out_ref):
    def run_head(x_ref, p_ref, descs):
        h = x_ref[...]                                        # f32 [B, d0]
        for (w_off, b_off, d_in, d_out, is_last) in descs:
            if is_last and latent == 1:
                # Final (d_in, 1) projection as VPU mul + XLU lane-reduce.
                w_row = p_ref[w_off:w_off + 1, 0:d_in]        # [1, d_in]
                bias = p_ref[b_off:b_off + 1, 0:1]            # [1, 1]
                h = jnp.sum(h * w_row, axis=-1, keepdims=True) + bias
            else:
                w = p_ref[w_off:w_off + d_in, 0:d_out]        # [d_in, d_out]
                bias = p_ref[b_off:b_off + 1, 0:d_out]        # [1, d_out]
                h = jnp.dot(h, w, preferred_element_type=jnp.float32) + bias
                if not is_last:
                    h = jnp.maximum(h, 0.0)                   # ReLU (hidden only)
        return h

    y1 = run_head(x1_ref, p1_ref, phi_desc)                   # [B, latent]
    y2 = run_head(x2_ref, p2_ref, psi_desc)                   # [B, latent]
    out_ref[:, 0:latent] = y1.astype(out_ref.dtype)
    out_ref[:, latent:2 * latent] = y2.astype(out_ref.dtype)


def measure_f_forward(x1, x2, phi_pack, psi_pack, phi_desc, psi_desc, latent):
    assert x1.shape[0] == x2.shape[0], "x1/x2 batch mismatch"
    batch = x1.shape[0]

    # Advisory cost estimate so XLA treats this as a cheap, schedulable call.
    flops = 0
    for (_, _, d_in, d_out, is_last) in phi_desc + psi_desc:
        eff_out = 1 if (is_last and latent == 1) else d_out
        flops += 2 * batch * d_in * eff_out
    bytes_accessed = 4 * (x1.size + x2.size + phi_pack.size + psi_pack.size
                          + batch * 2 * latent)

    vmem = pl.BlockSpec(memory_space=pltpu.MemorySpace.VMEM)
    kernel = functools.partial(_fused_measure_f_kernel, phi_desc, psi_desc, latent)
    out = pl.pallas_call(
        kernel,
        out_shape=jax.ShapeDtypeStruct((batch, 2 * latent), jnp.float32),
        in_specs=[vmem, vmem, vmem, vmem],
        out_specs=vmem,
        cost_estimate=pl.CostEstimate(flops=flops, transcendentals=0,
                                      bytes_accessed=bytes_accessed),
    )(x1, x2, phi_pack, psi_pack)
    return out[:, :latent], out[:, latent:]


def init_mlp_params(key, input_d, structure, output_d, dtype=jnp.float32):
    """PyTorch-Linear-style init; weights stored as [in, out]."""
    struc = [input_d] + list(structure) + [output_d]
    params = []
    for i in range(len(struc) - 1):
        key, kw, kb = jax.random.split(key, 3)
        bound = 1.0 / float(struc[i]) ** 0.5
        w = jax.random.uniform(kw, (struc[i], struc[i + 1]), dtype, -bound, bound)
        b = jax.random.uniform(kb, (struc[i + 1],), dtype, -bound, bound)
        params.append((w, b))
    return params


class MeasureF:
    """JAX/Pallas port of Measure_F: y1 = phi(x1), y2 = psi(x2)."""

    def __init__(self, key, view1_dim, view2_dim, phi_size, psi_size, latent_dim=1):
        k1, k2 = jax.random.split(key)
        self.latent_dim = latent_dim
        self.phi_params = init_mlp_params(k1, view1_dim, phi_size, latent_dim)
        self.psi_params = init_mlp_params(k2, view2_dim, psi_size, latent_dim)
        self.phi_pack, self.phi_desc = pack_mlp_params(self.phi_params, latent_dim)
        self.psi_pack, self.psi_desc = pack_mlp_params(self.psi_params, latent_dim)

    def __call__(self, x1, x2):
        return measure_f_forward(x1, x2, self.phi_pack, self.psi_pack,
                                 self.phi_desc, self.psi_desc, self.latent_dim)


if __name__ == "__main__":
    key = jax.random.PRNGKey(0)
    k_model, k_x1, k_x2 = jax.random.split(key, 3)

    batch = 8
    view1_dim, view2_dim = 32, 16
    phi_size, psi_size = [64, 32], [32]
    latent_dim = 1

    model = MeasureF(k_model, view1_dim, view2_dim, phi_size, psi_size, latent_dim)

    x1 = jax.random.normal(k_x1, (batch, view1_dim), jnp.float32)
    x2 = jax.random.normal(k_x2, (batch, view2_dim), jnp.float32)

    y1, y2 = model(x1, x2)
    jax.block_until_ready((y1, y2))

    # pure-JAX reference (unpacked params)
    def ref_mlp(x, params):
        h = x
        for i, (w, b) in enumerate(params):
            h = h @ w + b
            if i < len(params) - 1:
                h = jnp.maximum(h, 0.0)
        return h

    r1 = ref_mlp(x1, model.phi_params)
    r2 = ref_mlp(x2, model.psi_params)
    assert y1.shape == (batch, latent_dim) and y2.shape == (batch, latent_dim)
    assert jnp.allclose(y1, r1, atol=1e-3, rtol=1e-3)
    assert jnp.allclose(y2, r2, atol=1e-3, rtol=1e-3)

    print("KERNEL_OK")
</pallas_src>

<mosaic_0001>
module attributes {stable_mosaic.version = 11 : i64} {
  func.func @_fused_measure_f_kernel(%arg0: memref<8x32xf32, #tpu.memory_space<vmem>>, %arg1: memref<8x16xf32, #tpu.memory_space<vmem>>, %arg2: memref<128x128xf32, #tpu.memory_space<vmem>>, %arg3: memref<40x128xf32, #tpu.memory_space<vmem>>, %arg4: memref<8x2xf32, #tpu.memory_space<vmem>>) attributes {dimension_semantics = [], scalar_prefetch = 0 : i64, scratch_operands = 0 : i64, tpu.core_type = #tpu.core_type<tc>} {
    %c0 = arith.constant 0 : index
    %c0_0 = arith.constant 0 : index
    %0 = vector.load %arg0[%c0, %c0_0] : memref<8x32xf32, #tpu.memory_space<vmem>>, vector<8x32xf32>
    %c0_1 = arith.constant 0 : index
    %c0_2 = arith.constant 0 : index
    %1 = vector.load %arg2[%c0_1, %c0_2] : memref<128x128xf32, #tpu.memory_space<vmem>>, vector<32x64xf32>
    %c32 = arith.constant 32 : index
    %c0_3 = arith.constant 0 : index
    %2 = vector.load %arg2[%c32, %c0_3] : memref<128x128xf32, #tpu.memory_space<vmem>>, vector<1x64xf32>
    %cst = arith.constant dense<0.000000e+00> : vector<8x64xf32>
    %3 = tpu.matmul %0, %1, %cst {dimension_numbers = #tpu.dot_dimension_numbers<[1], [0], [0], [1], [0, 0, 1, 1], [], []>} : vector<8x32xf32>, vector<32x64xf32>, vector<8x64xf32> -> vector<8x64xf32>
    %4 = vector.broadcast %2 : vector<1x64xf32> to vector<8x64xf32>
    %5 = arith.addf %3, %4 : vector<8x64xf32>
    %cst_4 = arith.constant 0.000000e+00 : f32
    %6 = vector.broadcast %cst_4 : f32 to vector<8x64xf32>
    %7 = arith.maximumf %5, %6 : vector<8x64xf32>
    %c40 = arith.constant 40 : index
    %c0_5 = arith.constant 0 : index
    %8 = vector.load %arg2[%c40, %c0_5] : memref<128x128xf32, #tpu.memory_space<vmem>>, vector<64x32xf32>
    %c104 = arith.constant 104 : index
    %c0_6 = arith.constant 0 : index
    %9 = vector.load %arg2[%c104, %c0_6] : memref<128x128xf32, #tpu.memory_space<vmem>>, vector<1x32xf32>
    %cst_7 = arith.constant dense<0.000000e+00> : vector<8x32xf32>
    %10 = tpu.matmul %7, %8, %cst_7 {dimension_numbers = #tpu.dot_dimension_numbers<[1], [0], [0], [1], [0, 0, 1, 1], [], []>} : vector<8x64xf32>, vector<64x32xf32>, vector<8x32xf32> -> vector<8x32xf32>
    %11 = vector.broadcast %9 : vector<1x32xf32> to vector<8x32xf32>
    %12 = arith.addf %10, %11 : vector<8x32xf32>
    %cst_8 = arith.constant 0.000000e+00 : f32
    %13 = vector.broadcast %cst_8 : f32 to vector<8x32xf32>
    %14 = arith.maximumf %12, %13 : vector<8x32xf32>
    %c112 = arith.constant 112 : index
    %c0_9 = arith.constant 0 : index
    %15 = vector.load %arg2[%c112, %c0_9] : memref<128x128xf32, #tpu.memory_space<vmem>>, vector<1x32xf32>
    %c120 = arith.constant 120 : index
    %c0_10 = arith.constant 0 : index
    %16 = vector.load %arg2[%c120, %c0_10] : memref<128x128xf32, #tpu.memory_space<vmem>>, vector<1x1xf32>
    %17 = vector.broadcast %15 : vector<1x32xf32> to vector<8x32xf32>
    %18 = arith.mulf %14, %17 : vector<8x32xf32>
    %cst_11 = arith.constant dense<0.000000e+00> : vector<8xf32>
    %19 = vector.multi_reduction <add>, %18, %cst_11 [1] : vector<8x32xf32> to vector<8xf32>
    %20 = vector.shape_cast %19 : vector<8xf32> to vector<8x1xf32>
    %21 = vector.broadcast %16 : vector<1x1xf32> to vector<8x1xf32>
    %22 = arith.addf %20, %21 : vector<8x1xf32>
    %c0_12 = arith.constant 0 : index
    %c0_13 = arith.constant 0 : index
    %23 = vector.load %arg1[%c0_12, %c0_13] : memref<8x16xf32, #tpu.memory_space<vmem>>, vector<8x16xf32>
    %c0_14 = arith.constant 0 : index
    %c0_15 = arith.constant 0 : index
    %24 = vector.load %arg3[%c0_14, %c0_15] : memref<40x128xf32, #tpu.memory_space<vmem>>, vector<16x32xf32>
    %c16 = arith.constant 16 : index
    %c0_16 = arith.constant 0 : index
    %25 = vector.load %arg3[%c16, %c0_16] : memref<40x128xf32, #tpu.memory_space<vmem>>, vector<1x32xf32>
    %cst_17 = arith.constant dense<0.000000e+00> : vector<8x32xf32>
    %26 = tpu.matmul %23, %24, %cst_17 {dimension_numbers = #tpu.dot_dimension_numbers<[1], [0], [0], [1], [0, 0, 1, 1], [], []>} : vector<8x16xf32>, vector<16x32xf32>, vector<8x32xf32> -> vector<8x32xf32>
    %27 = vector.broadcast %25 : vector<1x32xf32> to vector<8x32xf32>
    %28 = arith.addf %26, %27 : vector<8x32xf32>
    %cst_18 = arith.constant 0.000000e+00 : f32
    %29 = vector.broadcast %cst_18 : f32 to vector<8x32xf32>
    %30 = arith.maximumf %28, %29 : vector<8x32xf32>
    %c24 = arith.constant 24 : index
    %c0_19 = arith.constant 0 : index
    %31 = vector.load %arg3[%c24, %c0_19] : memref<40x128xf32, #tpu.memory_space<vmem>>, vector<1x32xf32>
    %c32_20 = arith.constant 32 : index
    %c0_21 = arith.constant 0 : index
    %32 = vector.load %arg3[%c32_20, %c0_21] : memref<40x128xf32, #tpu.memory_space<vmem>>, vector<1x1xf32>
    %33 = vector.broadcast %31 : vector<1x32xf32> to vector<8x32xf32>
    %34 = arith.mulf %30, %33 : vector<8x32xf32>
    %cst_22 = arith.constant dense<0.000000e+00> : vector<8xf32>
    %35 = vector.multi_reduction <add>, %34, %cst_22 [1] : vector<8x32xf32> to vector<8xf32>
    %36 = vector.shape_cast %35 : vector<8xf32> to vector<8x1xf32>
    %37 = vector.broadcast %32 : vector<1x1xf32> to vector<8x1xf32>
    %38 = arith.addf %36, %37 : vector<8x1xf32>
    %c0_23 = arith.constant 0 : index
    %c0_24 = arith.constant 0 : index
    %39 = vector.load %arg4[%c0_23, %c0_24] : memref<8x2xf32, #tpu.memory_space<vmem>>, vector<8x1xf32>
    tpu.vector_store %arg4[%c0_23, %c0_24], %22 {strides = array<i32>} : memref<8x2xf32, #tpu.memory_space<vmem>>, vector<8x1xf32>,
    %c0_25 = arith.constant 0 : index
    %c1 = arith.constant 1 : index
    %40 = vector.load %arg4[%c0_25, %c1] : memref<8x2xf32, #tpu.memory_space<vmem>>, vector<8x1xf32>
    tpu.vector_store %arg4[%c0_25, %c1], %38 {strides = array<i32>} : memref<8x2xf32, #tpu.memory_space<vmem>>, vector<8x1xf32>,
    return
  }
}

</mosaic_0001>

<llo_original>
// kernel: tpu_custom_call.1
$region0: #{tpu_custom_call.1}
  #allocation0 [shape = 'u32[]', space=smem, size = 0x4, offset = 0x4, fixed_abs, tag = 'smem constant byte address 0x4 - core index']
  #allocation1 [shape = 'u32[72,128]{1,0:T(1,128)}', space=vmem, size = 0x9000, scoped, tag = 'internal scratch']
  %s0 = inlined_call_operand.hbm [shape: f32[8,32], index: 0, kind: input, shape index: {}]
  %s1 = inlined_call_operand.hbm [shape: f32[8,16], index: 1, kind: input, shape index: {}]
  %s2 = inlined_call_operand.hbm [shape: f32[128,128], index: 2, kind: input, shape index: {}]
  %s3 = inlined_call_operand.hbm [shape: f32[40,128], index: 3, kind: input, shape index: {}]
  %s4 = inlined_call_operand.vmem [shape: f32[8,2], index: 4, kind: output, shape index: {}]
  %s5 = sld [smem:[#allocation0]]
  $region42: #{tpu_custom_call.1} parent=0
    _
  %s7 = ssub.s32 1, %s5
  %s8 = scalar_select 0, %s7, %s5
  $region1: #{tpu_custom_call.1} parent=0
    #allocation2 [shape = 'u8[4096]{0}', space=vmem, size = 0x1000, scoped, tag = 'input window, operand 0, single buffered']
    #allocation3 [shape = 's32[1]{0}', space=sflag, size = 0x4, scoped, tag = 'scoped memory for tpu_custom_call.1']
    #allocation4 [shape = 'u8[4096]{0}', space=vmem, size = 0x1000, scoped, tag = 'input window, operand 1, single buffered']
    #allocation5 [shape = 's32[1]{0}', space=sflag, size = 0x4, scoped, tag = 'scoped memory for tpu_custom_call.1']
    #allocation6 [shape = 'u8[65536]{0}', space=vmem, size = 0x10000, scoped, tag = 'input window, operand 2, single buffered']
    #allocation7 [shape = 'u8[20480]{0}', space=vmem, size = 0x5000, scoped, tag = 'input window, operand 3, single buffered']
    #allocation8 [shape = 's32[1]{0}', space=sflag, size = 0x4, scoped, tag = 'scoped memory for tpu_custom_call.1']
    %9 = vsyncpa [#allocation3], 0
    %10 = vsyncpa [#allocation5], 0
    %11 = vsyncpa [#allocation8], 0
    // Predicated region
    $region2: #{tpu_custom_call.1} parent=1 // pred_check
      _
    $region3: #{tpu_custom_call.1} parent=1 // pred_check_branch
      %13 = sbr.rel (0) target = $region5
    $region4: #{tpu_custom_call.1} parent=1 // pred_region
      %15 = vsyncadd [#allocation3], 0
      %s17 = sshll.u32 %s0, 4
      %s18 = int_to_ptr.hbm [resolvable:$true] %s17
      %s19 = sshll.u32 [#allocation2], 4
      %s20 = int_to_ptr.vmem [resolvable:$true] %s19
      %22 = dma.hbm_to_vmem [thread:$0]  %s18, 128, %s20, [#allocation3]
    $region5: #{tpu_custom_call.1} parent=1 // pred_fallthru
      _
    // Predicated region
    $region6: #{tpu_custom_call.1} parent=1 // pred_check
      _
    $region7: #{tpu_custom_call.1} parent=1 // pred_check_branch
      %24 = sbr.rel (0) target = $region9
    $region8: #{tpu_custom_call.1} parent=1 // pred_region
      %26 = vsyncadd [#allocation5], 0
      %s28 = sshll.u32 %s1, 4
      %s29 = int_to_ptr.hbm [resolvable:$true] %s28
      %s30 = sshll.u32 [#allocation4], 4
      %s31 = int_to_ptr.vmem [resolvable:$true] %s30
      %33 = dma.hbm_to_vmem [thread:$0]  %s29, 128, %s31, [#allocation5]
    $region9: #{tpu_custom_call.1} parent=1 // pred_fallthru
      _
    // Predicated region
    $region10: #{tpu_custom_call.1} parent=1 // pred_check
      _
    $region11: #{tpu_custom_call.1} parent=1 // pred_check_branch
      %35 = sbr.rel (0) target = $region13
    $region12: #{tpu_custom_call.1} parent=1 // pred_region
      %37 = vsyncadd [#allocation5], 0
      %s38 = sshll.u32 %s2, 4
      %s39 = int_to_ptr.hbm [resolvable:$true] %s38
      %s40 = sshll.u32 [#allocation6], 4
      %s41 = int_to_ptr.vmem [resolvable:$true] %s40
      %46 = dma.hbm_to_vmem [thread:$0]  %s39, 2048, %s41, [#allocation5], 128, 128, 8
    $region13: #{tpu_custom_call.1} parent=1 // pred_fallthru
      _
    // Predicated region
    $region14: #{tpu_custom_call.1} parent=1 // pred_check
      _
    $region15: #{tpu_custom_call.1} parent=1 // pred_check_branch
      %48 = sbr.rel (0) target = $region17
    $region16: #{tpu_custom_call.1} parent=1 // pred_region
      %50 = vsyncadd [#allocation8], 0
      %s51 = sshll.u32 %s3, 4
      %s52 = int_to_ptr.hbm [resolvable:$true] %s51
      %s53 = sshll.u32 [#allocation7], 4
      %s54 = int_to_ptr.vmem [resolvable:$true] %s53
      %59 = dma.hbm_to_vmem [thread:$0]  %s52, 640, %s54, [#allocation8], 128, 128, 8
    $region17: #{tpu_custom_call.1} parent=1 // pred_fallthru
      _
    // Predicated region
    $region18: #{tpu_custom_call.1} parent=1 // pred_check
      _
    $region19: #{tpu_custom_call.1} parent=1 // pred_check_branch
      %61 = sbr.rel (0) target = $region21
    $region20: #{tpu_custom_call.1} parent=1 // pred_region
      %63 = dma.done [#allocation3], 128
    $region21: #{tpu_custom_call.1} parent=1 // pred_fallthru
      _
    // Predicated region
    $region22: #{tpu_custom_call.1} parent=1 // pred_check
      _
    $region23: #{tpu_custom_call.1} parent=1 // pred_check_branch
      %65 = sbr.rel (0) target = $region25
    $region24: #{tpu_custom_call.1} parent=1 // pred_region
      %67 = dma.done [#allocation5], 128
    $region25: #{tpu_custom_call.1} parent=1 // pred_fallthru
      _
    // Predicated region
    $region26: #{tpu_custom_call.1} parent=1 // pred_check
      _
    $region27: #{tpu_custom_call.1} parent=1 // pred_check_branch
      %69 = sbr.rel (0) target = $region29
    $region28: #{tpu_custom_call.1} parent=1 // pred_region
      %71 = dma.done [#allocation5], 2048
    $region29: #{tpu_custom_call.1} parent=1 // pred_fallthru
      _
    // Predicated region
    $region30: #{tpu_custom_call.1} parent=1 // pred_check
      _
    $region31: #{tpu_custom_call.1} parent=1 // pred_check_branch
      %73 = sbr.rel (0) target = $region33
    $region32: #{tpu_custom_call.1} parent=1 // pred_region
      %75 = dma.done [#allocation8], 640
    $region33: #{tpu_custom_call.1} parent=1 // pred_fallthru
      _
    %v76 = vld [vmem:[#allocation2] sm:$0xff]
    %v77 = vld [vmem:[#allocation6] sm:$0xff]
    %v78 = vld [vmem:[#allocation6 + $0x8] sm:$0xff]
    %v79 = vld [vmem:[#allocation6 + $0x10] sm:$0xff]
    %v80 = vld [vmem:[#allocation6 + $0x18] sm:$0xff]
    %v81 = vld [vmem:[#allocation6 + $0x20] sm:$0x1]
    %v82 = vperm.slane %v81, 0
    %vm83 = vcmask 261120
    %v85 = vsel %vm83, %v76, 0
    %87 = vmatpush.msra.mxu0 0.0
    %88 = vmatpush.msra.mxu0 0.0
    %89 = vmatpush.msra.mxu0 0.0
    %90 = vmatpush.msra.mxu0 0.0
    %91 = vmatpush.msra.mxu0 0.0
    %92 = vmatpush.msra.mxu0 0.0
    %93 = vmatpush.msra.mxu0 0.0
    %94 = vmatpush.msra.mxu0 0.0
    %95 = vmatpush.msra.mxu0 0.0
    %96 = vmatpush.msra.mxu0 0.0
    %97 = vmatpush.msra.mxu0 0.0
    %98 = vmatpush.msra.mxu0 0.0
    %99 = vmatpush.msra.mxu0 %v80
    %100 = vmatpush.msra.mxu0 %v79
    %101 = vmatpush.msra.mxu0 %v78
    %102 = vmatpush.msra.mxu0 %v77
    %103 = vmatmul.f32.gmra.mxu0 %v85
    %v104 = vpop.f32.mrf.mxu0
    %v105 = vadd.f32 %v82, %v104
    %106 = vdwg.mxu0
    %v107 = vmax.f32 %v105, 0.0
    %v108 = vld [vmem:[#allocation6 + $0x28] sm:$0xff]
    %v109 = vld [vmem:[#allocation6 + $0x30] sm:$0xff]
    %v110 = vld [vmem:[#allocation6 + $0x38] sm:$0xff]
    %v111 = vld [vmem:[#allocation6 + $0x40] sm:$0xff]
    %v112 = vld [vmem:[#allocation6 + $0x48] sm:$0xff]
    %v113 = vld [vmem:[#allocation6 + $0x50] sm:$0xff]
    %v114 = vld [vmem:[#allocation6 + $0x58] sm:$0xff]
    %v115 = vld [vmem:[#allocation6 + $0x60] sm:$0xff]
    %v116 = vld [vmem:[#allocation6 + $0x68] sm:$0x1]
    %v117 = vperm.slane %v116, 0
    %vm118 = vcmask 523264
    %v120 = vsel %vm118, %v107, 0
    %122 = vmatpush.msra.mxu0 0.0
    %123 = vmatpush.msra.mxu0 0.0
    %124 = vmatpush.msra.mxu0 0.0
    %125 = vmatpush.msra.mxu0 0.0
    %126 = vmatpush.msra.mxu0 0.0
    %127 = vmatpush.msra.mxu0 0.0
    %128 = vmatpush.msra.mxu0 0.0
    %129 = vmatpush.msra.mxu0 0.0
    %130 = vmatpush.msra.mxu0 %v115
    %131 = vmatpush.msra.mxu0 %v114
    %132 = vmatpush.msra.mxu0 %v113
    %133 = vmatpush.msra.mxu0 %v112
    %134 = vmatpush.msra.mxu0 %v111
    %135 = vmatpush.msra.mxu0 %v110
    %136 = vmatpush.msra.mxu0 %v109
    %137 = vmatpush.msra.mxu0 %v108
    %138 = vmatmul.f32.gmra.mxu0 %v120
    %v139 = vpop.f32.mrf.mxu0
    %v140 = vadd.f32 %v117, %v139
    %141 = vdwg.mxu0
    %v142 = vmax.f32 %v140, 0.0
    %v143 = vld [vmem:[#allocation6 + $0x70] sm:$0x1]
    %v144 = vld [vmem:[#allocation6 + $0x78] sm:$0x1]
    %v145 = vperm.slane %v143, 0
    %v146 = vmul.f32 %v142, %v145
    %v147 = vsel %vm83, %v146, 0.0
    %148 = vadd.xlane.f32.xlu0 %v147
    %v149 = vpop.xlane.xlu0 %148
    %v150 = vperm.slane %v144, 0
    %v151 = vadd.f32 %v149, %v150
    %v152 = vld [vmem:[#allocation4] sm:$0xff]
    %v153 = vld [vmem:[#allocation7] sm:$0xff]
    %v154 = vld [vmem:[#allocation7 + $0x8] sm:$0xff]
    %v155 = vld [vmem:[#allocation7 + $0x10] sm:$0x1]
    %v156 = vperm.slane %v155, 0
    %vm157 = vcmask 130048
    %v159 = vsel %vm157, %v152, 0
    %161 = vmatpush.msra.mxu0 0.0
    %162 = vmatpush.msra.mxu0 0.0
    %163 = vmatpush.msra.mxu0 0.0
    %164 = vmatpush.msra.mxu0 0.0
    %165 = vmatpush.msra.mxu0 0.0
    %166 = vmatpush.msra.mxu0 0.0
    %167 = vmatpush.msra.mxu0 0.0
    %168 = vmatpush.msra.mxu0 0.0
    %169 = vmatpush.msra.mxu0 0.0
    %170 = vmatpush.msra.mxu0 0.0
    %171 = vmatpush.msra.mxu0 0.0
    %172 = vmatpush.msra.mxu0 0.0
    %173 = vmatpush.msra.mxu0 0.0
    %174 = vmatpush.msra.mxu0 0.0
    %175 = vmatpush.msra.mxu0 %v154
    %176 = vmatpush.msra.mxu0 %v153
    %177 = vmatmul.f32.gmra.mxu0 %v159
    %v178 = vpop.f32.mrf.mxu0
    %v179 = vadd.f32 %v156, %v178
    %180 = vdwg.mxu0
    %v181 = vmax.f32 %v179, 0.0
    %v182 = vld [vmem:[#allocation7 + $0x18] sm:$0x1]
    %v183 = vld [vmem:[#allocation7 + $0x20] sm:$0x1]
    %v184 = vperm.slane %v182, 0
    %v185 = vmul.f32 %v181, %v184
    %v186 = vsel %vm83, %v185, 0.0
    %187 = vadd.xlane.f32.xlu0 %v186
    %v188 = vpop.xlane.xlu0 %187
    %v189 = vperm.slane %v183, 0
    %v190 = vadd.f32 %v188, %v189
    %vm191 = vcmask 7168
    %192 = vst.msk [vmem:[%s4] sm:$0xff] %vm191, %v151
    %194 = vrot.lane.b32.xlu0 %v190, 1
    %v195 = vpop.permute.xlu0 %194
    %vm197 = vcmask 15368
    %198 = vst.msk [vmem:[%s4] sm:$0xff] %vm197, %v195
    // Predicated region
    $region34: #{tpu_custom_call.1} parent=1 // pred_check
      _
    $region35: #{tpu_custom_call.1} parent=1 // pred_check_branch
      %200 = sbr.rel (0) target = $region37
    $region36: #{tpu_custom_call.1} parent=1 // pred_region
      _
    $region37: #{tpu_custom_call.1} parent=1 // pred_fallthru
      _
    // Predicated region
    $region38: #{tpu_custom_call.1} parent=1 // pred_check
      _
    $region39: #{tpu_custom_call.1} parent=1 // pred_check_branch
      %202 = sbr.rel (0) target = $region41
    $region40: #{tpu_custom_call.1} parent=1 // pred_region
      _
    $region41: #{tpu_custom_call.1} parent=1 // pred_fallthru
      _
    %203 = vsyncpa [#allocation3], 1
    %204 = vsyncpa [#allocation5], 1
    %205 = vsyncpa [#allocation8], 1

</llo_original>
